<compile_context>
chip_gen: v7x
topology: tpu7x:2x2x1
jax: 0.10.0
libtpu: 0.0.40
codegen_flags: <defaults>
</compile_context>

<pallas_src>
import math

import jax
import jax.numpy as jnp
from jax.experimental import pallas as pl
from jax.experimental.pallas import tpu as pltpu

_EPS = 1e-12  # F.normalize eps


def _ntxent_kernel(q_ref, k_ref, pos_ref, corr_ref, out_ref, denom_ref):
    """grid = (query blocks ["parallel"], key blocks ["arbitrary"])."""
    ki = pl.program_id(1)

    @pl.when(ki == 0)
    def _init():
        denom_ref[...] = jnp.zeros_like(denom_ref)

    # (tq, tk) tile of sim/T.  Queries are pre-normalized *and* pre-scaled by
    # 1/T; keys are pre-normalized.  Contract dim 1 of both operands -> MXU
    # transposed-RHS path, no in-kernel transpose / relayout.
    sim = jax.lax.dot_general(
        q_ref[...], k_ref[...],
        dimension_numbers=(((1,), (1,)), ((), ())),
        preferred_element_type=jnp.float32)

    # NOTE: no max-subtraction, matching the reference; safe for cosine sims in
    # [-1, 1] at typical temperatures (f32 overflow only below T ~ 1/88).
    denom_ref[...] += jnp.sum(jnp.exp(sim), axis=1, keepdims=True)

    @pl.when(ki == pl.num_programs(1) - 1)
    def _finalize():
        # corr = exp(self_sim/T) + (#padded keys): removes the self term and
        # the exp(0)=1 contributions of zero-padded key rows.
        # -log(exp(pos/T) / denom) == log(denom) - pos/T  (pos already has 1/T).
        out_ref[...] = jnp.log(denom_ref[...] - corr_ref[...]) - pos_ref[...]


def _round_up(x, m):
    return ((x + m - 1) // m) * m


def _vmem_limit_bytes(tq, tk, d, mm_bytes):
    # Dominant VMEM cost: double-buffered query + key tiles; the (tq, 1)
    # pos/corr/out/denom buffers are noise.
    need = 2 * (tq + tk) * d * mm_bytes + 8 * tq * 4 + (2 << 20)
    if need <= (24 << 20):
        return None            # default scoped VMEM is enough on v5e/v6e/v7x
    return min(need + (8 << 20), 100 << 20)


def contrastive_loss(emb_i, emb_j, temperature=0.5, *,
                     block_q=512, block_k=512, matmul_dtype=jnp.bfloat16):
    """NT-Xent contrastive loss; tiled Pallas TPU kernel.

    matmul_dtype: MXU operand dtype (accumulation is always f32).  bf16
      (default) gives full-rate MXU and halves key-stream HBM bytes; pass
      jnp.float32 for bit-close agreement with the f32 reference.
    """
    assert emb_i.shape == emb_j.shape and emb_i.ndim == 2
    b, d = emb_i.shape
    n = 2 * b
    f32 = jnp.float32
    inv_t = f32(1.0 / float(temperature))
    mm_dtype = jnp.float32 if matmul_dtype is None else matmul_dtype

    # ---- XLA-side preprocessing: O(n*d), negligible vs the O(n^2*d) kernel ---
    ei = emb_i.astype(f32)
    ej = emb_j.astype(f32)

    def _normalize(x):  # F.normalize(dim=1): x / max(||x||, eps)
        nrm = jnp.sqrt(jnp.sum(x * x, axis=1, keepdims=True))
        return x / jnp.maximum(nrm, f32(_EPS))

    z_i = _normalize(ei)
    z_j = _normalize(ej)
    z = jnp.concatenate([z_i, z_j], axis=0)                      # (n, d)

    # positives: diag(sim,+B) == diag(sim,-B) == rowwise z_i . z_j, with 1/T.
    pos_half = jnp.sum(z_i * z_j, axis=1, keepdims=True)
    pos = jnp.concatenate([pos_half, pos_half], axis=0) * inv_t  # (n, 1) f32

    # MXU operands: fold 1/T into the (resident) query rows so the kernel never
    # scales the (tq, tk) sim tile; keys stay un-scaled.
    q_mm = (z * inv_t).astype(mm_dtype)                          # (n, d)
    k_mm = z.astype(mm_dtype)                                    # (n, d)

    # Self term of the denominator, computed with the same operand roundings as
    # the in-kernel matmul (bounds the bf16 residual bias; exact for f32).
    self_sim = jnp.sum(q_mm.astype(f32) * k_mm.astype(f32), axis=1, keepdims=True)

    # ---- block sizes / padding: never stream a full (n, d) key tile ----------
    tq = _round_up(min(block_q, _round_up(n, 8)), 8)
    tk = _round_up(min(block_k, _round_up(n, 8)), 8)
    n_pad = _round_up(n, math.lcm(tq, tk))
    n_extra = n_pad - n

    # Zero-padded key rows stay exactly zero after normalization/casting, so
    # each one contributes exactly exp(0) = 1 to every row's denominator; fold
    # that constant into the per-row correction together with the self term.
    corr = jnp.exp(self_sim) + f32(n_extra)                      # (n, 1) f32

    if n_extra:
        pad2 = ((0, n_extra), (0, 0))
        q_mm = jnp.pad(q_mm, pad2)
        k_mm = jnp.pad(k_mm, pad2)
        pos = jnp.pad(pos, pad2)
        corr = jnp.pad(corr, pad2)

    grid = (n_pad // tq, n_pad // tk)

    row_loss = pl.pallas_call(
        _ntxent_kernel,
        out_shape=jax.ShapeDtypeStruct((n_pad, 1), jnp.float32),
        grid_spec=pltpu.PrefetchScalarGridSpec(
            num_scalar_prefetch=0,
            grid=grid,
            in_specs=[
                # query rows (normalized, /T, mm dtype): resident over key axis
                pl.BlockSpec((tq, d), lambda qi, ki: (qi, 0)),
                # key rows (normalized, mm dtype): streamed along the reduction
                pl.BlockSpec((tk, d), lambda qi, ki: (ki, 0)),
                # positives/T per query row: resident
                pl.BlockSpec((tq, 1), lambda qi, ki: (qi, 0)),
                # denominator correction (self term + padded keys): resident
                pl.BlockSpec((tq, 1), lambda qi, ki: (qi, 0)),
            ],
            out_specs=pl.BlockSpec((tq, 1), lambda qi, ki: (qi, 0)),
            scratch_shapes=[pltpu.VMEM((tq, 1), jnp.float32)],   # running denom
        ),
        compiler_params=pltpu.CompilerParams(
            dimension_semantics=("parallel", "arbitrary"),
            vmem_limit_bytes=_vmem_limit_bytes(
                tq, tk, d, jnp.dtype(mm_dtype).itemsize)),
    )(q_mm, k_mm, pos, corr)

    # Padded query rows (if any) produce finite, unused values; exclude them.
    return jnp.sum(row_loss[:n]) / f32(n)


def _reference_loss(emb_i, emb_j, temperature=0.5):
    # Pure-JAX reference mirroring the PyTorch module.
    def norm(x):
        nrm = jnp.maximum(jnp.linalg.norm(x, axis=1, keepdims=True), 1e-12)
        return x / nrm

    b = emb_i.shape[0]
    reps = jnp.concatenate([norm(emb_i), norm(emb_j)], axis=0)
    sim = reps @ reps.T
    sim_ij = jnp.diagonal(sim, offset=b)
    sim_ji = jnp.diagonal(sim, offset=-b)
    positives = jnp.concatenate([sim_ij, sim_ji], axis=0)
    neg_mask = 1.0 - jnp.eye(2 * b, dtype=jnp.float32)
    nominator = jnp.exp(positives / temperature)
    denominator = jnp.sum(neg_mask * jnp.exp(sim / temperature), axis=1)
    loss_partial = -jnp.log(nominator / denominator)
    return jnp.sum(loss_partial) / (2.0 * b)


if __name__ == "__main__":
    temperature = 0.5
    key = jax.random.PRNGKey(0)
    k1, k2, k3, k4 = jax.random.split(key, 4)

    # Small shapes consistent with the module: batch=4 -> 8x8 similarity matrix.
    emb_i = jax.random.normal(k1, (4, 32), dtype=jnp.float32)
    emb_j = jax.random.normal(k2, (4, 32), dtype=jnp.float32)
    ref = jax.block_until_ready(_reference_loss(emb_i, emb_j, temperature))

    # f32 MXU path: bit-close to the reference.
    loss_f32 = jax.block_until_ready(
        contrastive_loss(emb_i, emb_j, temperature, matmul_dtype=jnp.float32))
    assert jnp.allclose(loss_f32, ref, rtol=1e-5, atol=1e-5), (loss_f32, ref)

    # Default bf16 MXU path (full-rate MXU, half key-stream HBM bytes).
    loss_bf16 = jax.block_until_ready(contrastive_loss(emb_i, emb_j, temperature))
    assert jnp.allclose(loss_bf16, ref, rtol=3e-2, atol=3e-2), (loss_bf16, ref)

    # Non-divisible n exercises the padding path: batch=5 -> n=10 padded to 16.
    emb_i5 = jax.random.normal(k3, (5, 32), dtype=jnp.float32)
    emb_j5 = jax.random.normal(k4, (5, 32), dtype=jnp.float32)
    ref5 = jax.block_until_ready(_reference_loss(emb_i5, emb_j5, temperature))
    loss5 = jax.block_until_ready(
        contrastive_loss(emb_i5, emb_j5, temperature, matmul_dtype=jnp.float32))
    assert jnp.allclose(loss5, ref5, rtol=1e-5, atol=1e-5), (loss5, ref5)

    # TODO(synk): the module's unused `labels`/`hyperbolic`/BCEWithLogits branch
    # is dead code in forward() and is intentionally not implemented.
    print("KERNEL_OK")
</pallas_src>

<mosaic_0001>
module attributes {stable_mosaic.version = 11 : i64} {
  func.func @_ntxent_kernel(%arg0: i32, %arg1: i32, %arg2: memref<8x32xf32, #tpu.memory_space<vmem>>, %arg3: memref<8x32xf32, #tpu.memory_space<vmem>>, %arg4: memref<8x1xf32, #tpu.memory_space<vmem>>, %arg5: memref<8x1xf32, #tpu.memory_space<vmem>>, %arg6: memref<8x1xf32, #tpu.memory_space<vmem>>, %arg7: memref<8x1xf32, #tpu.memory_space<vmem>>) attributes {dimension_semantics = [#tpu.dimension_semantics<parallel>, #tpu.dimension_semantics<arbitrary>], iteration_bounds = array<i64: 1, 1>, scalar_prefetch = 0 : i64, scratch_operands = 1 : i64, tpu.core_type = #tpu.core_type<tc>, window_params = [{transform_indices = @transform_0, window_bounds = array<i64: 8, 32>}, {transform_indices = @transform_1, window_bounds = array<i64: 8, 32>}, {transform_indices = @transform_2, window_bounds = array<i64: 8, 1>}, {transform_indices = @transform_3, window_bounds = array<i64: 8, 1>}, {transform_indices = @transform_4, window_bounds = array<i64: 8, 1>}]} {
    %c0_i32 = arith.constant 0 : i32
    %0 = arith.cmpi eq, %arg1, %c0_i32 : i32
    %1 = arith.extui %0 : i1 to i32
    %c0_i32_0 = arith.constant 0 : i32
    %2 = arith.cmpi ne, %1, %c0_i32_0 : i32
    scf.if %2 {
      %cst_11 = arith.constant 0.000000e+00 : f32
      %15 = vector.broadcast %cst_11 : f32 to vector<8x1xf32>
      %c0_12 = arith.constant 0 : index
      %c0_13 = arith.constant 0 : index
      %16 = vector.load %arg7[%c0_12, %c0_13] : memref<8x1xf32, #tpu.memory_space<vmem>>, vector<8x1xf32>
      tpu.vector_store %arg7[%c0_12, %c0_13], %15 {strides = array<i32>} : memref<8x1xf32, #tpu.memory_space<vmem>>, vector<8x1xf32>,
    } else {
    }
    %c0 = arith.constant 0 : index
    %c0_1 = arith.constant 0 : index
    %3 = vector.load %arg2[%c0, %c0_1] : memref<8x32xf32, #tpu.memory_space<vmem>>, vector<8x32xf32>
    %c0_2 = arith.constant 0 : index
    %c0_3 = arith.constant 0 : index
    %4 = vector.load %arg3[%c0_2, %c0_3] : memref<8x32xf32, #tpu.memory_space<vmem>>, vector<8x32xf32>
    %cst = arith.constant dense<0.000000e+00> : vector<8x8xf32>
    %5 = tpu.matmul %3, %4, %cst {dimension_numbers = #tpu.dot_dimension_numbers<[1], [1], [0], [0], [0, 0, 1, 0], [], []>} : vector<8x32xf32>, vector<8x32xf32>, vector<8x8xf32> -> vector<8x8xf32>
    %c0_4 = arith.constant 0 : index
    %c0_5 = arith.constant 0 : index
    %6 = vector.load %arg7[%c0_4, %c0_5] : memref<8x1xf32, #tpu.memory_space<vmem>>, vector<8x1xf32>
    %7 = math.exp %5 : vector<8x8xf32>
    %cst_6 = arith.constant dense<0.000000e+00> : vector<8xf32>
    %8 = vector.multi_reduction <add>, %7, %cst_6 [1] : vector<8x8xf32> to vector<8xf32>
    %9 = vector.shape_cast %8 : vector<8xf32> to vector<8x1xf32>
    %10 = arith.addf %6, %9 : vector<8x1xf32>
    %c0_7 = arith.constant 0 : index
    %c0_8 = arith.constant 0 : index
    %11 = vector.load %arg7[%c0_7, %c0_8] : memref<8x1xf32, #tpu.memory_space<vmem>>, vector<8x1xf32>
    tpu.vector_store %arg7[%c0_7, %c0_8], %10 {strides = array<i32>} : memref<8x1xf32, #tpu.memory_space<vmem>>, vector<8x1xf32>,
    %c0_i32_9 = arith.constant 0 : i32
    %12 = arith.cmpi eq, %arg1, %c0_i32_9 : i32
    %13 = arith.extui %12 : i1 to i32
    %c0_i32_10 = arith.constant 0 : i32
    %14 = arith.cmpi ne, %13, %c0_i32_10 : i32
    scf.if %14 {
      %c0_11 = arith.constant 0 : index
      %c0_12 = arith.constant 0 : index
      %15 = vector.load %arg7[%c0_11, %c0_12] : memref<8x1xf32, #tpu.memory_space<vmem>>, vector<8x1xf32>
      %c0_13 = arith.constant 0 : index
      %c0_14 = arith.constant 0 : index
      %16 = vector.load %arg5[%c0_13, %c0_14] : memref<8x1xf32, #tpu.memory_space<vmem>>, vector<8x1xf32>
      %17 = arith.subf %15, %16 : vector<8x1xf32>
      %18 = math.log %17 : vector<8x1xf32>
      %c0_15 = arith.constant 0 : index
      %c0_16 = arith.constant 0 : index
      %19 = vector.load %arg4[%c0_15, %c0_16] : memref<8x1xf32, #tpu.memory_space<vmem>>, vector<8x1xf32>
      %20 = arith.subf %18, %19 : vector<8x1xf32>
      %c0_17 = arith.constant 0 : index
      %c0_18 = arith.constant 0 : index
      %21 = vector.load %arg6[%c0_17, %c0_18] : memref<8x1xf32, #tpu.memory_space<vmem>>, vector<8x1xf32>
      tpu.vector_store %arg6[%c0_17, %c0_18], %20 {strides = array<i32>} : memref<8x1xf32, #tpu.memory_space<vmem>>, vector<8x1xf32>,
    } else {
    }
    return
  }
  func.func @transform_0(%arg0: i32, %arg1: i32) -> (i32, i32) {
    %c0_i32 = arith.constant 0 : i32
    %c0_i32_0 = arith.constant 0 : i32
    return %arg0, %c0_i32 : i32, i32
  }
  func.func @transform_1(%arg0: i32, %arg1: i32) -> (i32, i32) {
    %c0_i32 = arith.constant 0 : i32
    %c0_i32_0 = arith.constant 0 : i32
    return %arg1, %c0_i32 : i32, i32
  }
  func.func @transform_2(%arg0: i32, %arg1: i32) -> (i32, i32) {
    %c0_i32 = arith.constant 0 : i32
    %c0_i32_0 = arith.constant 0 : i32
    return %arg0, %c0_i32 : i32, i32
  }
  func.func @transform_3(%arg0: i32, %arg1: i32) -> (i32, i32) {
    %c0_i32 = arith.constant 0 : i32
    %c0_i32_0 = arith.constant 0 : i32
    return %arg0, %c0_i32 : i32, i32
  }
  func.func @transform_4(%arg0: i32, %arg1: i32) -> (i32, i32) {
    %c0_i32 = arith.constant 0 : i32
    %c0_i32_0 = arith.constant 0 : i32
    return %arg0, %c0_i32 : i32, i32
  }
}

</mosaic_0001>

<llo_original>
// kernel: tpu_custom_call.1
$region0: #{tpu_custom_call.1}
  #allocation0 [shape = 'u32[]', space=smem, size = 0x4, offset = 0x4, fixed_abs, tag = 'smem constant byte address 0x4 - core index']
  #allocation1 [shape = 'u32[144,128]{1,0:T(1,128)}', space=vmem, size = 0x12000, scoped, tag = 'internal scratch']
  #allocation2 [shape = 'f32[8,1]{1,0:T(8,128)}', space=vmem, size = 0x1000, scoped, tag = 'scratch operand']
  %s0 = inlined_call_operand.vmem [shape: f32[8,32], index: 0, kind: input, shape index: {}]
  %s1 = inlined_call_operand.vmem [shape: f32[8,32], index: 1, kind: input, shape index: {}]
  %s2 = inlined_call_operand.vmem [shape: f32[8,1], index: 2, kind: input, shape index: {}]
  %s3 = inlined_call_operand.vmem [shape: f32[8,1], index: 3, kind: input, shape index: {}]
  %s4 = inlined_call_operand.vmem [shape: f32[8,1], index: 4, kind: output, shape index: {}]
  %s5 = sld [smem:[#allocation0]]
  $region34: #{tpu_custom_call.1} parent=0
    _
  %s7 = ssub.s32 1, %s5
  %s8 = scalar_select 0, %s7, %s5
  // Predicated region
  $region2: #{tpu_custom_call.1} parent=0 // pred_check
    _
  $region3: #{tpu_custom_call.1} parent=0 // pred_check_branch
    %10 = sbr.rel (0) target = $region5
  $region4: #{tpu_custom_call.1} parent=0 // pred_region
    _
  $region5: #{tpu_custom_call.1} parent=0 // pred_fallthru
    _
  // Predicated region
  $region6: #{tpu_custom_call.1} parent=0 // pred_check
    _
  $region7: #{tpu_custom_call.1} parent=0 // pred_check_branch
    %12 = sbr.rel (0) target = $region9
  $region8: #{tpu_custom_call.1} parent=0 // pred_region
    _
  $region9: #{tpu_custom_call.1} parent=0 // pred_fallthru
    _
  // Predicated region
  $region10: #{tpu_custom_call.1} parent=0 // pred_check
    _
  $region11: #{tpu_custom_call.1} parent=0 // pred_check_branch
    %14 = sbr.rel (0) target = $region13
  $region12: #{tpu_custom_call.1} parent=0 // pred_region
    _
  $region13: #{tpu_custom_call.1} parent=0 // pred_fallthru
    _
  // Predicated region
  $region14: #{tpu_custom_call.1} parent=0 // pred_check
    _
  $region15: #{tpu_custom_call.1} parent=0 // pred_check_branch
    %16 = sbr.rel (0) target = $region17
  $region16: #{tpu_custom_call.1} parent=0 // pred_region
    _
  $region17: #{tpu_custom_call.1} parent=0 // pred_fallthru
    _
  %p17 = scmp.eq.s32.totalorder 0, 0
  // Predicated region
  $region18: #{tpu_custom_call.1} parent=0 // pred_check
    %p18 = pneg %p17
  $region19: #{tpu_custom_call.1} parent=0 // pred_check_branch
    %20 = sbr.rel (%p18) target = $region21
  $region20: #{tpu_custom_call.1} parent=0 // pred_region
    %vm21 = vcmask 7168
    %22 = vst.msk [vmem:[#allocation2] sm:$0xff] %vm21, 0.0
  $region21: #{tpu_custom_call.1} parent=0 // pred_fallthru
    _
  %v23 = vld [vmem:[%s0] sm:$0xff]
  %v24 = vld [vmem:[%s1] sm:$0xff]
  %vm25 = vcmask 261120
  %v27 = vsel %vm25, %v23, 0
  %v30 = vsel %vm25, %v24, 0
  %32 = vmatprep.subr.mxu0 0.0
  %33 = vmatpush1.xpose.msra.mxu0 %v30
  %34 = vmatprep.subr.mxu0 0.0
  %35 = vmatpush1.xpose.msra.mxu0 0.0
  %36 = vmatprep.subr.mxu0 0.0
  %37 = vmatpush1.xpose.msra.mxu0 0.0
  %38 = vmatprep.subr.mxu0 0.0
  %39 = vmatpush1.xpose.msra.mxu0 0.0
  %40 = vmatprep.subr.mxu0 0.0
  %41 = vmatpush1.xpose.msra.mxu0 0.0
  %42 = vmatprep.subr.mxu0 0.0
  %43 = vmatpush1.xpose.msra.mxu0 0.0
  %44 = vmatprep.subr.mxu0 0.0
  %45 = vmatpush1.xpose.msra.mxu0 0.0
  %46 = vmatprep.subr.mxu0 0.0
  %47 = vmatpush1.xpose.msra.mxu0 0.0
  %48 = vmatprep.subr.mxu0 0.0
  %49 = vmatpush1.xpose.msra.mxu0 0.0
  %50 = vmatprep.subr.mxu0 0.0
  %51 = vmatpush1.xpose.msra.mxu0 0.0
  %52 = vmatprep.subr.mxu0 0.0
  %53 = vmatpush1.xpose.msra.mxu0 0.0
  %54 = vmatprep.subr.mxu0 0.0
  %55 = vmatpush1.xpose.msra.mxu0 0.0
  %56 = vmatprep.subr.mxu0 0.0
  %57 = vmatpush1.xpose.msra.mxu0 0.0
  %58 = vmatprep.subr.mxu0 0.0
  %59 = vmatpush1.xpose.msra.mxu0 0.0
  %60 = vmatprep.subr.mxu0 0.0
  %61 = vmatpush1.xpose.msra.mxu0 0.0
  %62 = vmatprep.subr.mxu0 0.0
  %63 = vmatpush1.xpose.msra.mxu0 0.0
  %64 = vmatprep.subr.mxu0 0.0
  %65 = vmatpush1.xpose.msra.mxu0 0.0
  %66 = vmatprep.subr.mxu0 0.0
  %67 = vmatpush1.xpose.msra.mxu0 0.0
  %68 = vmatprep.subr.mxu0 0.0
  %69 = vmatpush1.xpose.msra.mxu0 0.0
  %70 = vmatprep.subr.mxu0 0.0
  %71 = vmatpush1.xpose.msra.mxu0 0.0
  %72 = vmatprep.subr.mxu0 0.0
  %73 = vmatpush1.xpose.msra.mxu0 0.0
  %74 = vmatprep.subr.mxu0 0.0
  %75 = vmatpush1.xpose.msra.mxu0 0.0
  %76 = vmatprep.subr.mxu0 0.0
  %77 = vmatpush1.xpose.msra.mxu0 0.0
  %78 = vmatprep.subr.mxu0 0.0
  %79 = vmatpush1.xpose.msra.mxu0 0.0
  %80 = vmatprep.subr.mxu0 0.0
  %81 = vmatpush1.xpose.msra.mxu0 0.0
  %82 = vmatprep.subr.mxu0 0.0
  %83 = vmatpush1.xpose.msra.mxu0 0.0
  %84 = vmatprep.subr.mxu0 0.0
  %85 = vmatpush1.xpose.msra.mxu0 0.0
  %86 = vmatprep.subr.mxu0 0.0
  %87 = vmatpush1.xpose.msra.mxu0 0.0
  %88 = vmatprep.subr.mxu0 0.0
  %89 = vmatpush1.xpose.msra.mxu0 0.0
  %90 = vmatprep.subr.mxu0 0.0
  %91 = vmatpush1.xpose.msra.mxu0 0.0
  %92 = vmatprep.subr.mxu0 0.0
  %93 = vmatpush1.xpose.msra.mxu0 0.0
  %94 = vmatprep.subr.mxu0 0.0
  %95 = vmatpush1.xpose.msra.mxu0 0.0
  %96 = vmatprep.mubr.f32.mxu0 0.0
  %97 = vmatmul.mubr.f32.gmra.mrb[0].mxu0 %v27
  %v98 = vpop.f32.mrb[0].mxu0
  %v99 = vadd.f32 0.0, %v98
  %v100 = vpop.f32.mrb[0].mxu0
  %101 = vdwg.mxu0
  %v102 = vld [vmem:[#allocation2] sm:$0xff]
  %v103 = vmul.f32 %v99, 1.442695
  %v104 = vpow.pop %v103
  %vm105 = vcmask 64512
  %v106 = vsel %vm105, %v104, 0.0
  %107 = vadd.xlane.f32.xlu0 %v106
  %v108 = vpop.xlane.xlu0 %107
  %v109 = vadd.f32 %v102, %v108
  %vm110 = vcmask 7168
  %111 = vst.msk [vmem:[#allocation2] sm:$0xff] %vm110, %v109
  // Predicated region
  $region22: #{tpu_custom_call.1} parent=0 // pred_check
    %p112 = pneg %p17
  $region23: #{tpu_custom_call.1} parent=0 // pred_check_branch
    %114 = sbr.rel (%p112) target = $region25
  $region24: #{tpu_custom_call.1} parent=0 // pred_region
    %v115 = vld [vmem:[#allocation2] sm:$0xff]
    %v116 = vld [vmem:[%s3] sm:$0xff]
    %v117 = vsub.f32 %v115, %v116
    %v118 = vlog2.pop %v117
    %v119 = vmul.f32 %v118, 0.6931472
    %v120 = vld [vmem:[%s2] sm:$0xff]
    %v121 = vsub.f32 %v119, %v120
    %122 = vst.msk [vmem:[%s4] sm:$0xff] %vm110, %v121
  $region25: #{tpu_custom_call.1} parent=0 // pred_fallthru
    _
  // Predicated region
  $region26: #{tpu_custom_call.1} parent=0 // pred_check
    _
  $region27: #{tpu_custom_call.1} parent=0 // pred_check_branch
    %124 = sbr.rel (0) target = $region29
  $region28: #{tpu_custom_call.1} parent=0 // pred_region
    _
  $region29: #{tpu_custom_call.1} parent=0 // pred_fallthru
    _
  // Predicated region
  $region30: #{tpu_custom_call.1} parent=0 // pred_check
    _
  $region31: #{tpu_custom_call.1} parent=0 // pred_check_branch
    %126 = sbr.rel (0) target = $region33
  $region32: #{tpu_custom_call.1} parent=0 // pred_region
    _
  $region33: #{tpu_custom_call.1} parent=0 // pred_fallthru
    _

</llo_original>
